<compile_context>
chip_gen: v6e
topology: v6e:2x2x1
jax: 0.10.0
libtpu: 0.0.40
codegen_flags: <defaults>
</compile_context>

<pallas_src>
import jax
import jax.numpy as jnp
from jax import lax
from jax.experimental import pallas as pl
from jax.experimental.pallas import tpu as pltpu

_LANES = 384            # 64 boxes * 6 coords per row == 3 full vreg widths
_BOXES_PER_ROW = 64
_MAX_TR = 512           # rows per grid step -> 32768 boxes/step
_VMEM_LIMIT = 32 * 1024 * 1024


def _round_up(n, m):
    return ((n + m - 1) // m) * m


def _cdiv(a, b):
    return (a + b - 1) // b


# ----------------------------------------------------------------------------- kernels

def _loss_lanes(p, t):
    """p, t: (TR, 384) lane-interleaved [x1 y1 z1 x2 y2 z2] * 64 boxes per row.

    Returns (TR, 384) with the per-box IoU loss at lanes j % 6 == 0; other lanes
    hold finite garbage that the callers mask / discard.  Lane rotates go to the
    XLU slot, everything else is dense VPU work.
    """
    L = p.shape[-1]

    def shift(x, k):                       # shifted[j] = x[j + k] (wrap only hits discarded lanes)
        return pltpu.roll(x, (L - k) % L, 1)

    p3 = shift(p, 3)
    t3 = shift(t, 3)
    size_p = p3 - p                        # max - min per coordinate (valid at lanes j % 6 < 3)
    size_t = t3 - t
    wh = jnp.maximum(jnp.minimum(p3, t3) - jnp.maximum(p, t), 0.0)

    def prod3(v):                          # v[j] * v[j+1] * v[j+2]  (valid at lanes j % 6 == 0)
        return v * shift(v, 1) * shift(v, 2)

    vol_p = prod3(size_p)
    vol_t = prod3(size_t)
    overlap = prod3(wh)

    union = jnp.maximum(vol_p + vol_t - overlap, jnp.float32(1e-6))
    return 1.0 - overlap * pl.reciprocal(union, approx=False)


def _lane_masks(shape, tr, n_boxes):
    """is_c0: lane is the x1 slot of a box; in_range: element belongs to a real box."""
    lane = lax.broadcasted_iota(jnp.int32, shape, 1)
    row = lax.broadcasted_iota(jnp.int32, shape, 0)
    # floor(lane / 6) for lane < 384 without integer division: (lane * 683) >> 12.
    box_in_row = jnp.right_shift(lane * 683, 12)
    is_c0 = lane == box_in_row * 6
    elem = (pl.program_id(0) * tr + row) * _LANES + lane      # global element index
    in_range = elem < n_boxes * 6
    return is_c0, in_range


def _make_sum_kernel(n_boxes, tr):
    def kernel(p_ref, t_ref, lsum_ref):
        p = p_ref[...]
        loss = _loss_lanes(p, t_ref[...])
        is_c0, in_rng = _lane_masks(p.shape, tr, n_boxes)
        part = jnp.sum(jnp.where(jnp.logical_and(is_c0, in_rng), loss, 0.0))
        lsum_ref[...] = jnp.full(lsum_ref.shape, part, jnp.float32)
    return kernel


def _make_weighted_sum_kernel(n_boxes, tr):
    def kernel(p_ref, t_ref, w_ref, lsum_ref, dsum_ref, wmax_ref):
        p = p_ref[...]
        w = w_ref[...]
        loss = _loss_lanes(p, t_ref[...]) * w
        is_c0, in_rng = _lane_masks(p.shape, tr, n_boxes)
        lsum = jnp.sum(jnp.where(jnp.logical_and(is_c0, in_rng), loss, 0.0))
        dsum = jnp.sum(jnp.where(in_rng, p * w, 0.0))     # fused degenerate (pred * weight).sum()
        wmax = jnp.max(jnp.where(in_rng, w, 0.0))         # fused "any(weight > 0)" probe
        lsum_ref[...] = jnp.full(lsum_ref.shape, lsum, jnp.float32)
        dsum_ref[...] = jnp.full(dsum_ref.shape, dsum, jnp.float32)
        wmax_ref[...] = jnp.full(wmax_ref.shape, wmax, jnp.float32)
    return kernel


def _elem_kernel(p_ref, t_ref, o_ref):
    o_ref[...] = _loss_lanes(p_ref[...], t_ref[...])


def _weighted_elem_kernel(p_ref, t_ref, w_ref, o_ref):
    o_ref[...] = _loss_lanes(p_ref[...], t_ref[...]) * w_ref[...]


# ----------------------------------------------------------------------------- wrappers

def _layout(pred2, target2, weight, n):
    """Free (N,6) -> (N/64, 384) views; pads only when N % 64 != 0 or N < 512."""
    n1 = _round_up(max(n, 1), _BOXES_PER_ROW)
    if n1 < 8 * _BOXES_PER_ROW:            # keep >= 8 sublane rows so block <= array
        n1 = 8 * _BOXES_PER_ROW
    r = n1 // _BOXES_PER_ROW
    tr = min(_MAX_TR, max(8, _round_up(_cdiv(r, 2), 8)))   # >= 2 grid steps when r > 8 (v7x)
    grid = _cdiv(r, tr)

    def lay(x):
        pad = n1 - x.shape[0]
        if pad:
            x = jnp.pad(x, ((0, pad), (0, 0)))
        return x.reshape(r, _LANES)

    pred_l = lay(pred2)
    target_l = lay(target2)
    w_l = None
    if weight is not None:
        w = jnp.asarray(weight, jnp.float32)
        if w.size == n:
            w2 = jnp.broadcast_to(w.reshape(n, 1), (n, 6))
        else:
            w2 = w.reshape(n, 6)
        w_l = lay(w2)
    return pred_l, target_l, w_l, r, tr, grid


def _pallas_loss_sums(pred2, target2, weight, n):
    """Fused sum path.  Returns (loss_sum, degenerate_sum_or_None, weight_max_or_None)."""
    pred_l, target_l, w_l, r, tr, grid = _layout(pred2, target2, weight, n)
    has_w = w_l is not None

    inputs = [pred_l, target_l] + ([w_l] if has_w else [])
    in_specs = [pl.BlockSpec((tr, _LANES), lambda i: (i, 0)) for _ in inputs]
    psum_shape = jax.ShapeDtypeStruct((8 * grid, 128), jnp.float32)
    psum_spec = pl.BlockSpec((8, 128), lambda i: (i, 0))

    if has_w:
        kernel = _make_weighted_sum_kernel(n, tr)
        out_shape = (psum_shape, psum_shape, psum_shape)
        out_specs = (psum_spec, psum_spec, psum_spec)
    else:
        kernel = _make_sum_kernel(n, tr)
        out_shape = psum_shape
        out_specs = psum_spec

    bytes_per_box = 48 + (24 if has_w else 0)
    cost = pl.CostEstimate(
        flops=int(40 * r * _LANES),
        transcendentals=0,
        bytes_accessed=int(bytes_per_box * r * _BOXES_PER_ROW + (3 if has_w else 1) * grid * 4096))

    outs = pl.pallas_call(
        kernel,
        out_shape=out_shape,
        grid_spec=pltpu.PrefetchScalarGridSpec(
            num_scalar_prefetch=0,
            grid=(grid,),
            in_specs=in_specs,
            out_specs=out_specs),
        compiler_params=pltpu.CompilerParams(
            dimension_semantics=("parallel",),
            vmem_limit_bytes=_VMEM_LIMIT),
        cost_estimate=cost,
    )(*inputs)

    def take(o):                            # one scalar per grid step (block was broadcast-filled)
        return o.reshape(grid, 8, 128)[:, 0, 0]

    if has_w:
        lsum_o, dsum_o, wmax_o = outs
        return jnp.sum(take(lsum_o)), jnp.sum(take(dsum_o)), jnp.max(take(wmax_o))
    return jnp.sum(take(outs)), None, None


def _pallas_loss_per_box(pred2, target2, weight, n):
    """reduction='none' path: per-box (weighted) loss of shape (n,)."""
    pred_l, target_l, w_l, r, tr, grid = _layout(pred2, target2, weight, n)
    has_w = w_l is not None
    inputs = [pred_l, target_l] + ([w_l] if has_w else [])
    in_specs = [pl.BlockSpec((tr, _LANES), lambda i: (i, 0)) for _ in inputs]
    kernel = _weighted_elem_kernel if has_w else _elem_kernel

    out = pl.pallas_call(
        kernel,
        out_shape=jax.ShapeDtypeStruct((r, _LANES), jnp.float32),
        grid_spec=pltpu.PrefetchScalarGridSpec(
            num_scalar_prefetch=0,
            grid=(grid,),
            in_specs=in_specs,
            out_specs=pl.BlockSpec((tr, _LANES), lambda i: (i, 0))),
        compiler_params=pltpu.CompilerParams(
            dimension_semantics=("parallel",),
            vmem_limit_bytes=_VMEM_LIMIT),
    )(*inputs)
    # Free bitcast back to (n1, 6); the per-box loss lives in column 0 (lane j % 6 == 0).
    return out.reshape(r * _BOXES_PER_ROW, 6)[:n, 0]


def _iou_loss_per_box_jax(pred2, target2):
    """Pure-JAX elementwise form (fast path for small N and correctness reference)."""
    vol_p = jnp.prod(pred2[:, 3:] - pred2[:, :3], axis=-1)
    vol_t = jnp.prod(target2[:, 3:] - target2[:, :3], axis=-1)
    lt = jnp.maximum(pred2[:, :3], target2[:, :3])
    rb = jnp.minimum(pred2[:, 3:], target2[:, 3:])
    overlap = jnp.prod(jnp.maximum(rb - lt, 0.0), axis=-1)
    union = jnp.maximum(vol_p + vol_t - overlap, 1e-6)
    return 1.0 - overlap / union


# ----------------------------------------------------------------------------- module

class AxisAlignedIoULoss:
    """JAX/Pallas port of mmdet3d AxisAlignedIoULoss (no learnable parameters)."""

    def __init__(self, reduction='mean', loss_weight=1.0, min_pallas_boxes=4096):
        assert reduction in ('none', 'sum', 'mean')
        self.reduction = reduction
        self.loss_weight = loss_weight
        self.min_pallas_boxes = min_pallas_boxes

    def __call__(self, pred, target, weight=None, avg_factor=None,
                 reduction_override=None, **kwargs):
        assert reduction_override in (None, 'none', 'mean', 'sum')
        reduction = reduction_override if reduction_override else self.reduction

        pred = jnp.asarray(pred, jnp.float32)
        target = jnp.asarray(target, jnp.float32)
        batch_shape = pred.shape[:-1]
        pred2 = pred.reshape(-1, 6)
        target2 = target.reshape(-1, 6)
        n = pred2.shape[0]
        use_pallas = n >= self.min_pallas_boxes

        if reduction == 'none':
            if use_pallas:
                loss = _pallas_loss_per_box(pred2, target2, weight, n)
            else:
                loss = _iou_loss_per_box_jax(pred2, target2)
                if weight is not None:
                    w = jnp.asarray(weight, jnp.float32)
                    wcol = w.reshape(n) if w.size == n else w.reshape(n, -1)[:, 0]
                    loss = loss * wcol
            return (loss * self.loss_weight).reshape(batch_shape)

        denom = float(avg_factor) if avg_factor is not None else float(max(n, 1))

        if use_pallas:
            lsum, dsum, wmax = _pallas_loss_sums(pred2, target2, weight, n)
        else:
            loss = _iou_loss_per_box_jax(pred2, target2)
            if weight is not None:
                w = jnp.asarray(weight, jnp.float32)
                w2 = (jnp.broadcast_to(w.reshape(n, 1), (n, 6))
                      if w.size == n else w.reshape(n, 6))
                lsum = jnp.sum(loss * w2[:, 0])
                dsum = jnp.sum(pred2 * w2)
                wmax = jnp.max(w2)
            else:
                lsum, dsum, wmax = jnp.sum(loss), None, None

        out = lsum / denom if reduction == 'mean' else lsum
        out = out * self.loss_weight
        if weight is not None:
            # Reference degenerate path: no positive weights -> (pred * weight).sum(),
            # NOT scaled by loss_weight.  Selected with jnp.where (jit-safe, no host sync).
            out = jnp.where(wmax > 0, out, dsum)
        return out


# ----------------------------------------------------------------------------- self-test

def _make_boxes(key, n):
    k1, k2, k3, k4 = jax.random.split(key, 4)
    p_min = jax.random.uniform(k1, (n, 3), jnp.float32, 0.0, 2.0)
    p_size = jax.random.uniform(k2, (n, 3), jnp.float32, 0.5, 2.0)
    t_min = jax.random.uniform(k3, (n, 3), jnp.float32, 0.0, 2.0)
    t_size = jax.random.uniform(k4, (n, 3), jnp.float32, 0.5, 2.0)
    return (jnp.concatenate([p_min, p_min + p_size], axis=-1),
            jnp.concatenate([t_min, t_min + t_size], axis=-1))


def _close(a, b, rtol=1e-4, atol=1e-4):
    return bool(jnp.allclose(jnp.asarray(a, jnp.float32), jnp.asarray(b, jnp.float32),
                             rtol=rtol, atol=atol))


if __name__ == "__main__":
    key = jax.random.PRNGKey(0)
    kb, kw, kb2, kw2 = jax.random.split(key, 4)

    # Small demo: 8 aligned box pairs, boxes are (x1, y1, z1, x2, y2, z2).
    N = 8
    pred, target = _make_boxes(kb, N)
    weight = jax.random.uniform(kw, (N,), jnp.float32, 0.0, 1.0)

    mod = AxisAlignedIoULoss(reduction='mean', loss_weight=1.0, min_pallas_boxes=0)  # force Pallas
    mod_auto = AxisAlignedIoULoss(reduction='mean', loss_weight=1.0)                 # pure-JAX fast path

    ref = _iou_loss_per_box_jax(pred, target)

    out_mean = jax.block_until_ready(mod(pred, target))
    out_sum = jax.block_until_ready(mod(pred, target, reduction_override='sum'))
    out_none = jax.block_until_ready(mod(pred, target, reduction_override='none'))
    out_w = jax.block_until_ready(mod(pred, target, weight=weight, avg_factor=3.0))
    out_auto = jax.block_until_ready(mod_auto(pred, target))
    out_zero_w = jax.block_until_ready(mod(pred, target, weight=jnp.zeros((N,), jnp.float32)))
    out_neg_w = jax.block_until_ready(mod(pred, target, weight=-0.5 * jnp.ones((N,), jnp.float32)))

    assert _close(out_mean, ref.mean()), (out_mean, ref.mean())
    assert _close(out_sum, ref.sum()), (out_sum, ref.sum())
    assert _close(out_none, ref)
    assert _close(out_w, (ref * weight).sum() / 3.0), (out_w, (ref * weight).sum() / 3.0)
    assert _close(out_auto, ref.mean())
    assert _close(out_zero_w, 0.0)
    assert _close(out_neg_w, (pred * (-0.5)).sum()), (out_neg_w, (pred * (-0.5)).sum())

    # Larger check: N not a multiple of 64, >= 2 grid steps, ragged last tile, loss_weight != 1.
    N2 = 1300
    pred2, target2 = _make_boxes(kb2, N2)
    weight2 = jax.random.uniform(kw2, (N2,), jnp.float32, 0.0, 1.0)
    ref2 = _iou_loss_per_box_jax(pred2, target2)

    mod2 = AxisAlignedIoULoss(reduction='sum', loss_weight=2.0, min_pallas_boxes=0)
    out2_sum = jax.block_until_ready(mod2(pred2, target2))
    out2_wmean = jax.block_until_ready(mod2(pred2, target2, weight=weight2,
                                            reduction_override='mean'))
    assert _close(out2_sum, 2.0 * ref2.sum(), rtol=1e-4, atol=1e-3)
    assert _close(out2_wmean, 2.0 * (ref2 * weight2).sum() / N2, rtol=1e-4, atol=1e-3)

    print("KERNEL_OK")
</pallas_src>

<mosaic_0001>
module attributes {stable_mosaic.version = 11 : i64} {
  func.func @kernel(%arg0: i32, %arg1: memref<8x384xf32, #tpu.memory_space<vmem>>, %arg2: memref<8x384xf32, #tpu.memory_space<vmem>>, %arg3: memref<8x128xf32, #tpu.memory_space<vmem>>) attributes {dimension_semantics = [#tpu.dimension_semantics<parallel>], iteration_bounds = array<i64: 1>, scalar_prefetch = 0 : i64, scratch_operands = 0 : i64, tpu.core_type = #tpu.core_type<tc>, window_params = [{transform_indices = @transform_0, window_bounds = array<i64: 8, 384>}, {transform_indices = @transform_1, window_bounds = array<i64: 8, 384>}, {transform_indices = @transform_2, window_bounds = array<i64: 8, 128>}]} {
    %c0 = arith.constant 0 : index
    %c0_0 = arith.constant 0 : index
    %0 = vector.load %arg1[%c0, %c0_0] : memref<8x384xf32, #tpu.memory_space<vmem>>, vector<8x384xf32>
    %c0_1 = arith.constant 0 : index
    %c0_2 = arith.constant 0 : index
    %1 = vector.load %arg2[%c0_1, %c0_2] : memref<8x384xf32, #tpu.memory_space<vmem>>, vector<8x384xf32>
    %c381_i32 = arith.constant 381 : i32
    %2 = tpu.dynamic_rotate %0 by %c381_i32 dim 1 : vector<8x384xf32>, i32 -> vector<8x384xf32>
    %c381_i32_3 = arith.constant 381 : i32
    %3 = tpu.dynamic_rotate %1 by %c381_i32_3 dim 1 : vector<8x384xf32>, i32 -> vector<8x384xf32>
    %4 = arith.subf %2, %0 : vector<8x384xf32>
    %5 = arith.subf %3, %1 : vector<8x384xf32>
    %6 = arith.minimumf %2, %3 : vector<8x384xf32>
    %7 = arith.maximumf %0, %1 : vector<8x384xf32>
    %8 = arith.subf %6, %7 : vector<8x384xf32>
    %cst = arith.constant 0.000000e+00 : f32
    %9 = vector.broadcast %cst : f32 to vector<8x384xf32>
    %10 = arith.maximumf %8, %9 : vector<8x384xf32>
    %c383_i32 = arith.constant 383 : i32
    %11 = tpu.dynamic_rotate %4 by %c383_i32 dim 1 : vector<8x384xf32>, i32 -> vector<8x384xf32>
    %12 = arith.mulf %4, %11 : vector<8x384xf32>
    %c382_i32 = arith.constant 382 : i32
    %13 = tpu.dynamic_rotate %4 by %c382_i32 dim 1 : vector<8x384xf32>, i32 -> vector<8x384xf32>
    %14 = arith.mulf %12, %13 : vector<8x384xf32>
    %c383_i32_4 = arith.constant 383 : i32
    %15 = tpu.dynamic_rotate %5 by %c383_i32_4 dim 1 : vector<8x384xf32>, i32 -> vector<8x384xf32>
    %16 = arith.mulf %5, %15 : vector<8x384xf32>
    %c382_i32_5 = arith.constant 382 : i32
    %17 = tpu.dynamic_rotate %5 by %c382_i32_5 dim 1 : vector<8x384xf32>, i32 -> vector<8x384xf32>
    %18 = arith.mulf %16, %17 : vector<8x384xf32>
    %c383_i32_6 = arith.constant 383 : i32
    %19 = tpu.dynamic_rotate %10 by %c383_i32_6 dim 1 : vector<8x384xf32>, i32 -> vector<8x384xf32>
    %20 = arith.mulf %10, %19 : vector<8x384xf32>
    %c382_i32_7 = arith.constant 382 : i32
    %21 = tpu.dynamic_rotate %10 by %c382_i32_7 dim 1 : vector<8x384xf32>, i32 -> vector<8x384xf32>
    %22 = arith.mulf %20, %21 : vector<8x384xf32>
    %23 = arith.addf %14, %18 : vector<8x384xf32>
    %24 = arith.subf %23, %22 : vector<8x384xf32>
    %cst_8 = arith.constant 9.99999997E-7 : f32
    %25 = vector.broadcast %cst_8 : f32 to vector<8x384xf32>
    %26 = arith.maximumf %24, %25 : vector<8x384xf32>
    %27 = tpu.reciprocal %26 : vector<8x384xf32> -> vector<8x384xf32>
    %28 = arith.mulf %22, %27 : vector<8x384xf32>
    %cst_9 = arith.constant 1.000000e+00 : f32
    %29 = vector.broadcast %cst_9 : f32 to vector<8x384xf32>
    %30 = arith.subf %29, %28 : vector<8x384xf32>
    %31 = tpu.iota {dimensions = array<i32: 1>} : vector<8x384xi32>
    %32 = tpu.iota {dimensions = array<i32: 0>} : vector<8x384xi32>
    %c683_i32 = arith.constant 683 : i32
    %33 = vector.broadcast %c683_i32 : i32 to vector<8x384xi32>
    %34 = arith.muli %31, %33 : vector<8x384xi32>
    %c12_i32 = arith.constant 12 : i32
    %35 = vector.broadcast %c12_i32 : i32 to vector<8x384xi32>
    %36 = arith.shrsi %34, %35 : vector<8x384xi32>
    %c6_i32 = arith.constant 6 : i32
    %37 = vector.broadcast %c6_i32 : i32 to vector<8x384xi32>
    %38 = arith.muli %36, %37 : vector<8x384xi32>
    %39 = arith.cmpi eq, %31, %38 : vector<8x384xi32>
    %c8_i32 = arith.constant 8 : i32
    %40 = arith.muli %arg0, %c8_i32 : i32
    %41 = vector.broadcast %40 : i32 to vector<8x384xi32>
    %42 = arith.addi %41, %32 : vector<8x384xi32>
    %c384_i32 = arith.constant 384 : i32
    %43 = vector.broadcast %c384_i32 : i32 to vector<8x384xi32>
    %44 = arith.muli %42, %43 : vector<8x384xi32>
    %45 = arith.addi %44, %31 : vector<8x384xi32>
    %c48_i32 = arith.constant 48 : i32
    %46 = vector.broadcast %c48_i32 : i32 to vector<8x384xi32>
    %47 = arith.cmpi slt, %45, %46 : vector<8x384xi32>
    %48 = arith.andi %39, %47 : vector<8x384xi1>
    %cst_10 = arith.constant 0.000000e+00 : f32
    %49 = vector.broadcast %cst_10 : f32 to vector<8x384xf32>
    %50 = arith.select %48, %30, %49 : vector<8x384xi1>, vector<8x384xf32>
    %51 = vector.shape_cast %50 : vector<8x384xf32> to vector<1x8x384xf32>
    %cst_11 = arith.constant dense<0.000000e+00> : vector<1xf32>
    %52 = vector.multi_reduction <add>, %51, %cst_11 [1, 2] : vector<1x8x384xf32> to vector<1xf32>
    %53 = vector.shape_cast %52 : vector<1xf32> to vector<1x1x1xf32>
    %54 = vector.extract %53[0, 0, 0] : f32 from vector<1x1x1xf32>
    %55 = vector.broadcast %54 : f32 to vector<8x128xf32>
    %c0_12 = arith.constant 0 : index
    %c0_13 = arith.constant 0 : index
    %56 = vector.load %arg3[%c0_12, %c0_13] : memref<8x128xf32, #tpu.memory_space<vmem>>, vector<8x128xf32>
    tpu.vector_store %arg3[%c0_12, %c0_13], %55 {strides = array<i32>} : memref<8x128xf32, #tpu.memory_space<vmem>>, vector<8x128xf32>,
    return
  }
  func.func @transform_0(%arg0: i32) -> (i32, i32) {
    %c0_i32 = arith.constant 0 : i32
    %c0_i32_0 = arith.constant 0 : i32
    return %arg0, %c0_i32 : i32, i32
  }
  func.func @transform_1(%arg0: i32) -> (i32, i32) {
    %c0_i32 = arith.constant 0 : i32
    %c0_i32_0 = arith.constant 0 : i32
    return %arg0, %c0_i32 : i32, i32
  }
  func.func @transform_2(%arg0: i32) -> (i32, i32) {
    %c0_i32 = arith.constant 0 : i32
    %c0_i32_0 = arith.constant 0 : i32
    return %arg0, %c0_i32 : i32, i32
  }
}

</mosaic_0001>

<llo_original>
// kernel: tpu_custom_call.1
$region0: #{tpu_custom_call.1}
  #allocation0 [shape = 'u32[]', space=smem, size = 0x4, offset = 0x4, fixed_abs, tag = 'smem constant byte address 0x4 - core index']
  #allocation1 [shape = 'u32[144,128]{1,0:T(1,128)}', space=vmem, size = 0x12000, scoped, tag = 'internal scratch']
  %s0 = inlined_call_operand.hbm [shape: f32[8,384], index: 0, kind: input, shape index: {}]
  %s1 = inlined_call_operand.hbm [shape: f32[8,384], index: 1, kind: input, shape index: {}]
  %s2 = inlined_call_operand.hbm [shape: f32[8,128], index: 2, kind: output, shape index: {}]
  %s3 = sld [smem:[#allocation0]]
  $region26: #{tpu_custom_call.1} parent=0
    _
  %s5 = ssub.s32 1, %s3
  %s6 = scalar_select 0, %s5, %s3
  $region1: #{tpu_custom_call.1} parent=0
    #allocation2 [shape = 'u8[12288]{0}', space=vmem, size = 0x3000, scoped, tag = 'input window, operand 0, single buffered']
    #allocation3 [shape = 's32[1]{0}', space=sflag, size = 0x4, scoped, tag = 'scoped memory for tpu_custom_call.1']
    #allocation4 [shape = 's32[1]{0}', space=sflag, size = 0x4, scoped, tag = 'scoped memory for tpu_custom_call.1']
    #allocation5 [shape = 'u8[12288]{0}', space=vmem, size = 0x3000, scoped, tag = 'input window, operand 1, single buffered']
    #allocation6 [shape = 's32[1]{0}', space=sflag, size = 0x4, scoped, tag = 'scoped memory for tpu_custom_call.1']
    #allocation7 [shape = 'u8[4096]{0}', space=vmem, size = 0x1000, scoped, tag = 'output window, operand 0, single buffered']
    %7 = vsyncpa [#allocation3], 0
    %8 = vsyncpa [#allocation6], 0
    %9 = vsyncpa [#allocation4], 0
    // Predicated region
    $region2: #{tpu_custom_call.1} parent=1 // pred_check
      _
    $region3: #{tpu_custom_call.1} parent=1 // pred_check_branch
      %11 = sbr.rel (0) target = $region5
    $region4: #{tpu_custom_call.1} parent=1 // pred_region
      %s13 = ssub.s32 384, 384
      %14 = vsyncadd [#allocation3], %s13
      %s16 = sshll.u32 [#allocation2], 4
      %s17 = int_to_ptr.vmem [resolvable:$true] %s16
      %19 = dma.hbm_to_vmem [thread:$0]  %s0, 384, %s17, [#allocation3]
    $region5: #{tpu_custom_call.1} parent=1 // pred_fallthru
      _
    // Predicated region
    $region6: #{tpu_custom_call.1} parent=1 // pred_check
      _
    $region7: #{tpu_custom_call.1} parent=1 // pred_check_branch
      %21 = sbr.rel (0) target = $region9
    $region8: #{tpu_custom_call.1} parent=1 // pred_region
      %s23 = ssub.s32 384, 384
      %24 = vsyncadd [#allocation6], %s23
      %s26 = sshll.u32 [#allocation5], 4
      %s27 = int_to_ptr.vmem [resolvable:$true] %s26
      %29 = dma.hbm_to_vmem [thread:$0]  %s1, 384, %s27, [#allocation6]
    $region9: #{tpu_custom_call.1} parent=1 // pred_fallthru
      _
    // Predicated region
    $region10: #{tpu_custom_call.1} parent=1 // pred_check
      _
    $region11: #{tpu_custom_call.1} parent=1 // pred_check_branch
      %31 = sbr.rel (0) target = $region13
    $region12: #{tpu_custom_call.1} parent=1 // pred_region
      %32 = dma.done [#allocation3], 384
    $region13: #{tpu_custom_call.1} parent=1 // pred_fallthru
      _
    // Predicated region
    $region14: #{tpu_custom_call.1} parent=1 // pred_check
      _
    $region15: #{tpu_custom_call.1} parent=1 // pred_check_branch
      %34 = sbr.rel (0) target = $region17
    $region16: #{tpu_custom_call.1} parent=1 // pred_region
      %35 = dma.done [#allocation6], 384
    $region17: #{tpu_custom_call.1} parent=1 // pred_fallthru
      _
    %v36 = vld [vmem:[#allocation2] sm:$0xff]
    %v37 = vld [vmem:[#allocation2 + $0x8] sm:$0xff]
    %v38 = vld [vmem:[#allocation2 + $0x10] sm:$0xff]
    %v39 = vld [vmem:[#allocation5] sm:$0xff]
    %v40 = vld [vmem:[#allocation5 + $0x8] sm:$0xff]
    %v41 = vld [vmem:[#allocation5 + $0x10] sm:$0xff]
    %42 = vrot.lane.b32.xlu0 %v36, 125
    %v43 = vpop.permute.xlu0 %42
    %44 = vrot.lane.b32.xlu0 %v37, 125
    %v45 = vpop.permute.xlu0 %44
    %46 = vrot.lane.b32.xlu0 %v38, 125
    %v47 = vpop.permute.xlu0 %46
    %v48 = vlaneseq
    %v49 = vand.u32 %v48, 127
    %vm50 = vcmp.lt.s32.totalorder %v49, 125
    %v51 = vsel %vm50, %v45, %v47
    %v52 = vsel %vm50, %v43, %v45
    %v53 = vsel %vm50, %v47, %v43
    %54 = vrot.lane.b32.xlu0 %v39, 125
    %v55 = vpop.permute.xlu0 %54
    %56 = vrot.lane.b32.xlu0 %v40, 125
    %v57 = vpop.permute.xlu0 %56
    %58 = vrot.lane.b32.xlu0 %v41, 125
    %v59 = vpop.permute.xlu0 %58
    %v60 = vsel %vm50, %v57, %v59
    %v61 = vsel %vm50, %v55, %v57
    %v62 = vsel %vm50, %v59, %v55
    %v63 = vsub.f32 %v52, %v36
    %v64 = vsub.f32 %v51, %v37
    %v65 = vsub.f32 %v53, %v38
    %v66 = vsub.f32 %v61, %v39
    %v67 = vsub.f32 %v60, %v40
    %v68 = vsub.f32 %v62, %v41
    %v69 = vmin.f32 %v52, %v61
    %v70 = vmin.f32 %v51, %v60
    %v71 = vmin.f32 %v53, %v62
    %v72 = vmax.f32 %v36, %v39
    %v73 = vmax.f32 %v37, %v40
    %v74 = vmax.f32 %v38, %v41
    %v75 = vsub.f32 %v69, %v72
    %v76 = vsub.f32 %v70, %v73
    %v77 = vsub.f32 %v71, %v74
    %v78 = vmax.f32 %v75, 0.0
    %v79 = vmax.f32 %v76, 0.0
    %v80 = vmax.f32 %v77, 0.0
    %81 = vrot.lane.b32.xlu0 %v63, 127
    %v82 = vpop.permute.xlu0 %81
    %83 = vrot.lane.b32.xlu0 %v64, 127
    %v84 = vpop.permute.xlu0 %83
    %85 = vrot.lane.b32.xlu0 %v65, 127
    %v86 = vpop.permute.xlu0 %85
    %vm87 = vcmp.lt.s32.totalorder %v49, 127
    %v88 = vsel %vm87, %v84, %v86
    %v89 = vsel %vm87, %v82, %v84
    %v90 = vsel %vm87, %v86, %v82
    %v91 = vmul.f32 %v63, %v89
    %v92 = vmul.f32 %v64, %v88
    %v93 = vmul.f32 %v65, %v90
    %94 = vrot.lane.b32.xlu0 %v63, 126
    %v95 = vpop.permute.xlu0 %94
    %96 = vrot.lane.b32.xlu0 %v64, 126
    %v97 = vpop.permute.xlu0 %96
    %98 = vrot.lane.b32.xlu0 %v65, 126
    %v99 = vpop.permute.xlu0 %98
    %vm100 = vcmp.lt.s32.totalorder %v49, 126
    %v101 = vsel %vm100, %v97, %v99
    %v102 = vsel %vm100, %v95, %v97
    %v103 = vsel %vm100, %v99, %v95
    %v104 = vmul.f32 %v91, %v102
    %v105 = vmul.f32 %v92, %v101
    %v106 = vmul.f32 %v93, %v103
    %107 = vrot.lane.b32.xlu0 %v66, 127
    %v108 = vpop.permute.xlu0 %107
    %109 = vrot.lane.b32.xlu0 %v67, 127
    %v110 = vpop.permute.xlu0 %109
    %111 = vrot.lane.b32.xlu0 %v68, 127
    %v112 = vpop.permute.xlu0 %111
    %v113 = vsel %vm87, %v110, %v112
    %v114 = vsel %vm87, %v108, %v110
    %v115 = vsel %vm87, %v112, %v108
    %v116 = vmul.f32 %v66, %v114
    %v117 = vmul.f32 %v67, %v113
    %v118 = vmul.f32 %v68, %v115
    %119 = vrot.lane.b32.xlu0 %v66, 126
    %v120 = vpop.permute.xlu0 %119
    %121 = vrot.lane.b32.xlu0 %v67, 126
    %v122 = vpop.permute.xlu0 %121
    %123 = vrot.lane.b32.xlu0 %v68, 126
    %v124 = vpop.permute.xlu0 %123
    %v125 = vsel %vm100, %v122, %v124
    %v126 = vsel %vm100, %v120, %v122
    %v127 = vsel %vm100, %v124, %v120
    %v128 = vmul.f32 %v116, %v126
    %v129 = vmul.f32 %v117, %v125
    %v130 = vmul.f32 %v118, %v127
    %131 = vrot.lane.b32.xlu0 %v78, 127
    %v132 = vpop.permute.xlu0 %131
    %133 = vrot.lane.b32.xlu0 %v79, 127
    %v134 = vpop.permute.xlu0 %133
    %135 = vrot.lane.b32.xlu0 %v80, 127
    %v136 = vpop.permute.xlu0 %135
    %v137 = vsel %vm87, %v134, %v136
    %v138 = vsel %vm87, %v132, %v134
    %v139 = vsel %vm87, %v136, %v132
    %v140 = vmul.f32 %v78, %v138
    %v141 = vmul.f32 %v79, %v137
    %v142 = vmul.f32 %v80, %v139
    %143 = vrot.lane.b32.xlu0 %v78, 126
    %v144 = vpop.permute.xlu0 %143
    %145 = vrot.lane.b32.xlu0 %v79, 126
    %v146 = vpop.permute.xlu0 %145
    %147 = vrot.lane.b32.xlu0 %v80, 126
    %v148 = vpop.permute.xlu0 %147
    %v149 = vsel %vm100, %v146, %v148
    %v150 = vsel %vm100, %v144, %v146
    %v151 = vsel %vm100, %v148, %v144
    %v152 = vmul.f32 %v140, %v150
    %v153 = vmul.f32 %v141, %v149
    %v154 = vmul.f32 %v142, %v151
    %v155 = vadd.f32 %v104, %v128
    %v156 = vadd.f32 %v105, %v129
    %v157 = vadd.f32 %v106, %v130
    %v158 = vsub.f32 %v155, %v152
    %v159 = vsub.f32 %v156, %v153
    %v160 = vsub.f32 %v157, %v154
    %v161 = vmax.f32 %v158, 1e-06
    %v162 = vmax.f32 %v159, 1e-06
    %v163 = vmax.f32 %v160, 1e-06
    %v164 = vrcp.pop %v161
    %v165 = vrcp.pop %v162
    %v166 = vrcp.pop %v163
    %v167 = vmul.f32 %v152, %v164
    %v168 = vmul.f32 %v153, %v165
    %v169 = vmul.f32 %v154, %v166
    %v170 = vsub.f32 1.0, %v167
    %v171 = vsub.f32 1.0, %v168
    %v172 = vsub.f32 1.0, %v169
    %v173 = vadd.s32 %v49, 128
    %v174 = vadd.s32 %v49, 256
    %v175 = vlaneseq
    %v176 = vshrl.u32 %v175, 7
    %v177 = vmul.u32 %v49, 683
    %v178 = vmul.u32 %v173, 683
    %v179 = vmul.u32 %v174, 683
    %v180 = vshra.s32 %v177, 12
    %v181 = vshra.s32 %v178, 12
    %v182 = vshra.s32 %v179, 12
    %v183 = vmul.u32 %v180, 6
    %v184 = vmul.u32 %v181, 6
    %v185 = vmul.u32 %v182, 6
    %vm186 = vcmp.eq.s32.totalorder %v49, %v183
    %vm187 = vcmp.eq.s32.totalorder %v173, %v184
    %vm188 = vcmp.eq.s32.totalorder %v174, %v185
    %s189 = smul.u32 0, 8
    %v190 = vstv %s189
    %v191 = vadd.s32 %v190, %v176
    %v192 = vmul.u32 %v191, 384
    %v193 = vadd.s32 %v192, %v49
    %v194 = vadd.s32 %v192, %v173
    %v195 = vadd.s32 %v192, %v174
    %vm196 = vcmp.lt.s32.totalorder %v193, 48
    %vm197 = vcmp.lt.s32.totalorder %v194, 48
    %vm198 = vcmp.lt.s32.totalorder %v195, 48
    %vm199 = vmand %vm186, %vm196
    %vm200 = vmand %vm187, %vm197
    %vm201 = vmand %vm188, %vm198
    %v202 = vsel %vm199, %v170, 0.0
    %v203 = vsel %vm200, %v171, 0.0
    %v204 = vsel %vm201, %v172, 0.0
    %v205 = vadd.f32 %v202, %v203
    %v206 = vadd.f32 %v205, %v204
    %207 = vadd.xlane.f32.xlu0 %v206
    %v208 = vpop.xlane.xlu0 %207
    %v209 = vrot.slane %v208, 4
    %v210 = vadd.f32 %v208, %v209
    %v211 = vrot.slane %v210, 2
    %v212 = vadd.f32 %v210, %v211
    %v213 = vrot.slane %v212, 1
    %v214 = vadd.f32 %v212, %v213
    %s215 = vtos %v214
    %v216 = vstv %s215
    %217 = vst [vmem:[#allocation7] sm:$0xff] %v216
    // Predicated region
    $region18: #{tpu_custom_call.1} parent=1 // pred_check
      _
    $region19: #{tpu_custom_call.1} parent=1 // pred_check_branch
      %219 = sbr.rel (0) target = $region21
    $region20: #{tpu_custom_call.1} parent=1 // pred_region
      %s221 = ssub.s32 128, 128
      %222 = vsyncadd [#allocation4], %s221
      %s224 = sshll.u32 [#allocation7], 4
      %s225 = int_to_ptr.vmem [resolvable:$true] %s224
      %227 = dma.vmem_to_hbm [thread:$0]  %s225, 128, %s2, [#allocation4]
    $region21: #{tpu_custom_call.1} parent=1 // pred_fallthru
      _
    // Predicated region
    $region22: #{tpu_custom_call.1} parent=1 // pred_check
      _
    $region23: #{tpu_custom_call.1} parent=1 // pred_check_branch
      %229 = sbr.rel (0) target = $region25
    $region24: #{tpu_custom_call.1} parent=1 // pred_region
      %230 = dma.done [#allocation4], 128
    $region25: #{tpu_custom_call.1} parent=1 // pred_fallthru
      _
    %231 = vsyncpa [#allocation3], 1
    %232 = vsyncpa [#allocation6], 1
    %233 = vsyncpa [#allocation4], 1

</llo_original>
